<compile_context>
chip_gen: v5e
topology: v5e:2x2
jax: 0.10.0
libtpu: 0.0.40
codegen_flags: <defaults>
</compile_context>

<pallas_src>
import math

import jax
import jax.numpy as jnp
from jax.experimental import pallas as pl
from jax.experimental.pallas import tpu as pltpu


def _gelu_tanh(x):
    # GELU with tanh approximation (matches nn.GELU(approximate='tanh')).
    c = math.sqrt(2.0 / math.pi)
    return 0.5 * x * (1.0 + jnp.tanh(c * (x + 0.044715 * x * x * x)))


def _round_up(n, m):
    return ((n + m - 1) // m) * m


def _make_mlp_kernel(th, resident):
    """Build the fused MLP kernel for hidden tile size `th`.

    resident=True  -> wfc/bfc/wpj refs hold the FULL weight/bias (C,H)/(1,H)/(H,C)
                      and the j-th chunk is sliced with pl.ds inside the kernel.
    resident=False -> wfc/bfc/wpj refs already hold the j-th (C,th)/(1,th)/(th,C)
                      chunk (streamed by BlockSpec).
    """

    def mlp_kernel(x_ref, wfc_ref, bfc_ref, wpj_ref, bpj_ref, o_ref, xb16_ref):
        # Grid: (row tiles i [parallel], hidden tiles j [arbitrary / reduction]).
        # x_ref:   (tm, C)  f32 row tile of the flattened activations
        # o_ref:   (tm, C)  f32 output tile; VMEM-resident across j (accumulator)
        # xb16_ref:(tm, C)  bf16 scratch: x cast once per row tile
        j = pl.program_id(1)

        @pl.when(j == 0)
        def _():
            xb16_ref[...] = x_ref[...].astype(jnp.bfloat16)
            o_ref[...] = jnp.zeros_like(o_ref)

        if resident:
            off = pl.multiple_of(j * th, th)
        else:
            off = 0
        wfc = wfc_ref[:, pl.ds(off, th)]    # (C, th)  bf16
        bfc = bfc_ref[:, pl.ds(off, th)]    # (1, th)  f32
        wpj = wpj_ref[pl.ds(off, th), :]    # (th, C)  bf16

        # bf16 operands on the MXU, f32 accumulation / element-wise math.
        h = jnp.dot(xb16_ref[...], wfc, preferred_element_type=jnp.float32)
        h = _gelu_tanh(h + bfc)             # f32 bias + tanh-GELU (EUP slot)
        o_ref[...] += jnp.dot(h.astype(jnp.bfloat16), wpj,
                              preferred_element_type=jnp.float32)

        @pl.when(j == pl.num_programs(1) - 1)
        def _():
            o_ref[...] = o_ref[...] + bpj_ref[...]

    return mlp_kernel


def prepare_mlp_params(w_fc, b_fc, w_proj, b_proj, compute_dtype=jnp.bfloat16):
    """Convert PyTorch nn.Linear params (weight (out,in), bias (out,)) to the
    kernel layout ONCE outside the hot path: (in,out) bf16 weights, f32 biases."""
    H, C = w_fc.shape
    wfc_t = jnp.asarray(w_fc, dtype=compute_dtype).T        # (C, H)
    wpj_t = jnp.asarray(w_proj, dtype=compute_dtype).T      # (H, C)
    bfc2 = jnp.asarray(b_fc, dtype=jnp.float32).reshape(1, H)
    bpj2 = jnp.asarray(b_proj, dtype=jnp.float32).reshape(1, C)
    return wfc_t, bfc2, wpj_t, bpj2


def mlp_pallas(x, wfc_t, bfc2, wpj_t, bpj2, *, tm=512, th=None,
               vmem_limit_bytes=None):
    """x: (B, T, C) f32.  wfc_t: (C, H) bf16, bfc2: (1, H) f32,
    wpj_t: (H, C) bf16, bpj2: (1, C) f32 (from prepare_mlp_params)."""
    B, T, C = x.shape
    H = wfc_t.shape[1]
    M = B * T
    x_item = jnp.dtype(x.dtype).itemsize
    w_item = jnp.dtype(wfc_t.dtype).itemsize

    # ---- hidden-dim tile: largest of {1024,512,256,128} dividing H ----------
    if th is None:
        for cand in (1024, 512, 256, 128):
            if H % cand == 0:
                th = cand
                break
        else:
            th = H
    if th % 128 != 0 or H % th != 0:
        th = H

    # ---- row tile: multiple of 8; keep >=2 row tiles when M is big enough ---
    tm = max(8, min(tm, _round_up(M, 8)))
    if M >= 512:
        tm = min(tm, _round_up(pl.cdiv(M, 2), 8))
    n_row = pl.cdiv(M, tm)
    n_hid = H // th

    # ---- resident-vs-streamed weights ---------------------------------------
    wbytes = 2 * C * H * w_item                       # both weight matrices
    act_buf = 4 * tm * C * x_item + tm * C * 2        # x/out double-buffers + bf16 scratch
    # budget 2x weights (conservative: pipeline buffers), keep total <= ~40 MiB
    resident = (2 * wbytes + act_buf + (1 << 20)) <= (40 << 20)

    if resident:
        wfc_spec = pl.BlockSpec((C, H), lambda i, j: (0, 0))
        bfc_spec = pl.BlockSpec((1, H), lambda i, j: (0, 0))
        wpj_spec = pl.BlockSpec((H, C), lambda i, j: (0, 0))
        weight_stream_factor = 1
        wblk_bytes = wbytes
    else:
        wfc_spec = pl.BlockSpec((C, th), lambda i, j: (0, j))
        bfc_spec = pl.BlockSpec((1, th), lambda i, j: (0, j))
        wpj_spec = pl.BlockSpec((th, C), lambda i, j: (j, 0))
        weight_stream_factor = n_row
        wblk_bytes = 2 * C * th * w_item

    # ---- VMEM budget (right-sized, capped below v7x's 64 MiB per TC) --------
    if vmem_limit_bytes is None:
        need = act_buf + 2 * wblk_bytes + 2 * (H + C) * 4 * 8 + (2 << 20)
        vmem_limit_bytes = int(min(max(need, 16 << 20), 48 << 20))

    x2 = x.reshape(M, C)   # no pad / slice: ragged last block handled by Pallas

    # ---- advisory cost estimate ---------------------------------------------
    flops = 4 * M * C * H                          # two matmuls
    transcendentals = M * H                        # tanh in GELU
    bytes_accessed = (2 * M * C * x_item           # x in + out
                      + weight_stream_factor * wbytes
                      + (H + C) * 4)
    cost = pl.CostEstimate(flops=flops, transcendentals=transcendentals,
                           bytes_accessed=bytes_accessed)

    out = pl.pallas_call(
        _make_mlp_kernel(th, resident),
        out_shape=jax.ShapeDtypeStruct((M, C), x.dtype),
        grid_spec=pltpu.PrefetchScalarGridSpec(
            num_scalar_prefetch=0,
            grid=(n_row, n_hid),
            in_specs=[
                pl.BlockSpec((tm, C), lambda i, j: (i, 0)),   # x row tile
                wfc_spec,                                     # c_fc weight
                bfc_spec,                                     # c_fc bias
                wpj_spec,                                     # c_proj weight
                pl.BlockSpec((1, C), lambda i, j: (0, 0)),    # c_proj bias
            ],
            out_specs=pl.BlockSpec((tm, C), lambda i, j: (i, 0)),
            scratch_shapes=[pltpu.VMEM((tm, C), jnp.bfloat16)],   # bf16 x cache
        ),
        compiler_params=pltpu.CompilerParams(
            dimension_semantics=("parallel", "arbitrary"),
            vmem_limit_bytes=vmem_limit_bytes),
        cost_estimate=cost,
    )(x2, wfc_t, bfc2, wpj_t, bpj2)

    return out.reshape(B, T, C)


def mlp_reference(x, w_fc, b_fc, w_proj, b_proj):
    # Pure-JAX f32 reference with PyTorch parameter conventions.
    h = jnp.einsum('btc,hc->bth', x, w_fc) + b_fc
    h = _gelu_tanh(h)
    return jnp.einsum('bth,ch->btc', h, w_proj) + b_proj


def _run_case(key, B, T, C, tm=512):
    H = 4 * C
    kx, k1, k2, k3, k4 = jax.random.split(key, 5)
    x = jax.random.normal(kx, (B, T, C), dtype=jnp.float32)
    # nn.Linear shapes: weight (out, in), bias (out,)
    w_fc = jax.random.normal(k1, (H, C), dtype=jnp.float32) * 0.02
    b_fc = jax.random.normal(k2, (H,), dtype=jnp.float32) * 0.02
    w_proj = jax.random.normal(k3, (C, H), dtype=jnp.float32) * 0.02
    b_proj = jax.random.normal(k4, (C,), dtype=jnp.float32) * 0.02

    params = prepare_mlp_params(w_fc, b_fc, w_proj, b_proj)  # once, outside hot path
    y = mlp_pallas(x, *params, tm=tm)
    y = jax.block_until_ready(y)

    y_ref = mlp_reference(x, w_fc, b_fc, w_proj, b_proj)
    assert y.shape == (B, T, C)
    # bf16 matmul operands with f32 accumulation -> slightly looser tolerance.
    assert jnp.allclose(y, y_ref, atol=5e-3, rtol=5e-2), "mismatch vs reference"


if __name__ == "__main__":
    key = jax.random.PRNGKey(0)
    k_small, k_big = jax.random.split(key)

    # Small GPT-2-like config: batch=2, seq=8, n_embd=32, hidden=128.
    _run_case(k_small, B=2, T=8, C=32)

    # Larger case exercising multi-row-tile grid, the ragged last row block
    # (M=600 with tm capped to 304 -> 2 tiles) and the resident-weights path.
    _run_case(k_big, B=2, T=300, C=128, tm=512)

    print("KERNEL_OK")
</pallas_src>

<mosaic_0001>
module attributes {stable_mosaic.version = 11 : i64} {
  func.func @mlp_kernel(%arg0: i32, %arg1: i32, %arg2: memref<16x32xf32, #tpu.memory_space<vmem>>, %arg3: memref<32x128xbf16, #tpu.memory_space<vmem>>, %arg4: memref<1x128xf32, #tpu.memory_space<vmem>>, %arg5: memref<128x32xbf16, #tpu.memory_space<vmem>>, %arg6: memref<1x32xf32, #tpu.memory_space<vmem>>, %arg7: memref<16x32xf32, #tpu.memory_space<vmem>>, %arg8: memref<16x32xbf16, #tpu.memory_space<vmem>>) attributes {dimension_semantics = [#tpu.dimension_semantics<parallel>, #tpu.dimension_semantics<arbitrary>], iteration_bounds = array<i64: 1, 1>, scalar_prefetch = 0 : i64, scratch_operands = 1 : i64, tpu.core_type = #tpu.core_type<tc>, window_params = [{transform_indices = @transform_0, window_bounds = array<i64: 16, 32>}, {pipeline_mode = #tpu.pipeline_mode<synchronous>, transform_indices = @transform_1, window_bounds = array<i64: 32, 128>}, {pipeline_mode = #tpu.pipeline_mode<synchronous>, transform_indices = @transform_2, window_bounds = array<i64: 1, 128>}, {pipeline_mode = #tpu.pipeline_mode<synchronous>, transform_indices = @transform_3, window_bounds = array<i64: 128, 32>}, {pipeline_mode = #tpu.pipeline_mode<synchronous>, transform_indices = @transform_4, window_bounds = array<i64: 1, 32>}, {transform_indices = @transform_5, window_bounds = array<i64: 16, 32>}]} {
    %c0_i32 = arith.constant 0 : i32
    %0 = arith.cmpi eq, %arg1, %c0_i32 : i32
    %1 = arith.extui %0 : i1 to i32
    %c0_i32_0 = arith.constant 0 : i32
    %2 = arith.cmpi ne, %1, %c0_i32_0 : i32
    scf.if %2 {
      %c0_16 = arith.constant 0 : index
      %c0_17 = arith.constant 0 : index
      %36 = vector.load %arg2[%c0_16, %c0_17] : memref<16x32xf32, #tpu.memory_space<vmem>>, vector<16x32xf32>
      %37 = arith.truncf %36 : vector<16x32xf32> to vector<16x32xbf16>
      %c0_18 = arith.constant 0 : index
      %c0_19 = arith.constant 0 : index
      %38 = vector.load %arg8[%c0_18, %c0_19] : memref<16x32xbf16, #tpu.memory_space<vmem>>, vector<16x32xbf16>
      tpu.vector_store %arg8[%c0_18, %c0_19], %37 {strides = array<i32>} : memref<16x32xbf16, #tpu.memory_space<vmem>>, vector<16x32xbf16>,
      %cst_20 = arith.constant 0.000000e+00 : f32
      %39 = vector.broadcast %cst_20 : f32 to vector<16x32xf32>
      %c0_21 = arith.constant 0 : index
      %c0_22 = arith.constant 0 : index
      %40 = vector.load %arg7[%c0_21, %c0_22] : memref<16x32xf32, #tpu.memory_space<vmem>>, vector<16x32xf32>
      tpu.vector_store %arg7[%c0_21, %c0_22], %39 {strides = array<i32>} : memref<16x32xf32, #tpu.memory_space<vmem>>, vector<16x32xf32>,
    } else {
    }
    %c128_i32 = arith.constant 128 : i32
    %3 = arith.muli %arg1, %c128_i32 : i32
    %4 = tpu.assume_multiple %3, 128 : i32
    %c0 = arith.constant 0 : index
    %5 = arith.index_cast %4 : i32 to index
    %6 = vector.load %arg3[%c0, %5] : memref<32x128xbf16, #tpu.memory_space<vmem>>, vector<32x128xbf16>
    %c0_1 = arith.constant 0 : index
    %7 = arith.index_cast %4 : i32 to index
    %8 = vector.load %arg4[%c0_1, %7] : memref<1x128xf32, #tpu.memory_space<vmem>>, vector<1x128xf32>
    %9 = arith.index_cast %4 : i32 to index
    %c0_2 = arith.constant 0 : index
    %10 = vector.load %arg5[%9, %c0_2] : memref<128x32xbf16, #tpu.memory_space<vmem>>, vector<128x32xbf16>
    %c0_3 = arith.constant 0 : index
    %c0_4 = arith.constant 0 : index
    %11 = vector.load %arg8[%c0_3, %c0_4] : memref<16x32xbf16, #tpu.memory_space<vmem>>, vector<16x32xbf16>
    %cst = arith.constant dense<0.000000e+00> : vector<16x128xf32>
    %12 = tpu.matmul %11, %6, %cst {dimension_numbers = #tpu.dot_dimension_numbers<[1], [0], [0], [1], [0, 0, 1, 1], [], []>} : vector<16x32xbf16>, vector<32x128xbf16>, vector<16x128xf32> -> vector<16x128xf32>
    %13 = vector.broadcast %8 : vector<1x128xf32> to vector<16x128xf32>
    %14 = arith.addf %12, %13 : vector<16x128xf32>
    %cst_5 = arith.constant 5.000000e-01 : f32
    %15 = vector.broadcast %cst_5 : f32 to vector<16x128xf32>
    %16 = arith.mulf %15, %14 : vector<16x128xf32>
    %cst_6 = arith.constant 4.471500e-02 : f32
    %17 = vector.broadcast %cst_6 : f32 to vector<16x128xf32>
    %18 = arith.mulf %17, %14 : vector<16x128xf32>
    %19 = arith.mulf %18, %14 : vector<16x128xf32>
    %20 = arith.mulf %19, %14 : vector<16x128xf32>
    %21 = arith.addf %14, %20 : vector<16x128xf32>
    %cst_7 = arith.constant 0.797884583 : f32
    %22 = vector.broadcast %cst_7 : f32 to vector<16x128xf32>
    %23 = arith.mulf %22, %21 : vector<16x128xf32>
    %24 = math.tanh %23 : vector<16x128xf32>
    %cst_8 = arith.constant 1.000000e+00 : f32
    %25 = vector.broadcast %cst_8 : f32 to vector<16x128xf32>
    %26 = arith.addf %25, %24 : vector<16x128xf32>
    %27 = arith.mulf %16, %26 : vector<16x128xf32>
    %c0_9 = arith.constant 0 : index
    %c0_10 = arith.constant 0 : index
    %28 = vector.load %arg7[%c0_9, %c0_10] : memref<16x32xf32, #tpu.memory_space<vmem>>, vector<16x32xf32>
    %29 = arith.truncf %27 : vector<16x128xf32> to vector<16x128xbf16>
    %cst_11 = arith.constant dense<0.000000e+00> : vector<16x32xf32>
    %30 = tpu.matmul %29, %10, %cst_11 {dimension_numbers = #tpu.dot_dimension_numbers<[1], [0], [0], [1], [0, 0, 1, 1], [], []>} : vector<16x128xbf16>, vector<128x32xbf16>, vector<16x32xf32> -> vector<16x32xf32>
    %31 = arith.addf %28, %30 : vector<16x32xf32>
    %c0_12 = arith.constant 0 : index
    %c0_13 = arith.constant 0 : index
    %32 = vector.load %arg7[%c0_12, %c0_13] : memref<16x32xf32, #tpu.memory_space<vmem>>, vector<16x32xf32>
    tpu.vector_store %arg7[%c0_12, %c0_13], %31 {strides = array<i32>} : memref<16x32xf32, #tpu.memory_space<vmem>>, vector<16x32xf32>,
    %c0_i32_14 = arith.constant 0 : i32
    %33 = arith.cmpi eq, %arg1, %c0_i32_14 : i32
    %34 = arith.extui %33 : i1 to i32
    %c0_i32_15 = arith.constant 0 : i32
    %35 = arith.cmpi ne, %34, %c0_i32_15 : i32
    scf.if %35 {
      %c0_16 = arith.constant 0 : index
      %c0_17 = arith.constant 0 : index
      %36 = vector.load %arg7[%c0_16, %c0_17] : memref<16x32xf32, #tpu.memory_space<vmem>>, vector<16x32xf32>
      %c0_18 = arith.constant 0 : index
      %c0_19 = arith.constant 0 : index
      %37 = vector.load %arg6[%c0_18, %c0_19] : memref<1x32xf32, #tpu.memory_space<vmem>>, vector<1x32xf32>
      %38 = vector.broadcast %37 : vector<1x32xf32> to vector<16x32xf32>
      %39 = arith.addf %36, %38 : vector<16x32xf32>
      %c0_20 = arith.constant 0 : index
      %c0_21 = arith.constant 0 : index
      %40 = vector.load %arg7[%c0_20, %c0_21] : memref<16x32xf32, #tpu.memory_space<vmem>>, vector<16x32xf32>
      tpu.vector_store %arg7[%c0_20, %c0_21], %39 {strides = array<i32>} : memref<16x32xf32, #tpu.memory_space<vmem>>, vector<16x32xf32>,
    } else {
    }
    return
  }
  func.func @transform_0(%arg0: i32, %arg1: i32) -> (i32, i32) {
    %c0_i32 = arith.constant 0 : i32
    %c0_i32_0 = arith.constant 0 : i32
    return %arg0, %c0_i32 : i32, i32
  }
  func.func @transform_1(%arg0: i32, %arg1: i32) -> (i32, i32) {
    %c0_i32 = arith.constant 0 : i32
    %c0_i32_0 = arith.constant 0 : i32
    %c0_i32_1 = arith.constant 0 : i32
    return %c0_i32, %c0_i32_0 : i32, i32
  }
  func.func @transform_2(%arg0: i32, %arg1: i32) -> (i32, i32) {
    %c0_i32 = arith.constant 0 : i32
    %c0_i32_0 = arith.constant 0 : i32
    %c0_i32_1 = arith.constant 0 : i32
    return %c0_i32, %c0_i32_0 : i32, i32
  }
  func.func @transform_3(%arg0: i32, %arg1: i32) -> (i32, i32) {
    %c0_i32 = arith.constant 0 : i32
    %c0_i32_0 = arith.constant 0 : i32
    %c0_i32_1 = arith.constant 0 : i32
    return %c0_i32, %c0_i32_0 : i32, i32
  }
  func.func @transform_4(%arg0: i32, %arg1: i32) -> (i32, i32) {
    %c0_i32 = arith.constant 0 : i32
    %c0_i32_0 = arith.constant 0 : i32
    %c0_i32_1 = arith.constant 0 : i32
    return %c0_i32, %c0_i32_0 : i32, i32
  }
  func.func @transform_5(%arg0: i32, %arg1: i32) -> (i32, i32) {
    %c0_i32 = arith.constant 0 : i32
    %c0_i32_0 = arith.constant 0 : i32
    return %arg0, %c0_i32 : i32, i32
  }
}

</mosaic_0001>

<llo_original>
// kernel: tpu_custom_call.1
$region0: #{tpu_custom_call.1}
  #allocation0 [shape = 'u32[]', space=smem, size = 0x4, offset = 0x4, fixed_abs, tag = 'smem constant byte address 0x4 - core index']
  #allocation1 [shape = 'u32[72,128]{1,0:T(1,128)}', space=vmem, size = 0x9000, scoped, tag = 'internal scratch']
  #allocation2 [shape = 'bf16[16,32]{1,0:T(8,128)(2,1)}', space=vmem, size = 0x1000, scoped, tag = 'scratch operand']
  %s0 = inlined_call_operand.vmem [shape: f32[16,32], index: 0, kind: input, shape index: {}]
  %s1 = inlined_call_operand.vmem [shape: bf16[32,128], index: 1, kind: input, shape index: {}]
  %s2 = inlined_call_operand.vmem [shape: f32[1,128], index: 2, kind: input, shape index: {}]
  %s3 = inlined_call_operand.vmem [shape: bf16[128,32], index: 3, kind: input, shape index: {}]
  %s4 = inlined_call_operand.vmem [shape: f32[1,32], index: 4, kind: input, shape index: {}]
  %s5 = inlined_call_operand.hbm [shape: f32[16,32], index: 5, kind: output, shape index: {}]
  %s6 = sld [smem:[#allocation0]]
  $region38: #{tpu_custom_call.1} parent=0
    _
  %s8 = ssub.s32 1, %s6
  %s9 = scalar_select 0, %s8, %s6
  $region1: #{tpu_custom_call.1} parent=0
    #allocation3 [shape = 'u8[8192]{0}', space=vmem, size = 0x2000, scoped, tag = 'output window, operand 0, single buffered']
    #allocation4 [shape = 's32[1]{0}', space=sflag, size = 0x4, scoped, tag = 'scoped memory for tpu_custom_call.1']
    %10 = vsyncpa [#allocation4], 0
    // Predicated region
    $region2: #{tpu_custom_call.1} parent=1 // pred_check
      _
    $region3: #{tpu_custom_call.1} parent=1 // pred_check_branch
      %12 = sbr.rel (0) target = $region5
    $region4: #{tpu_custom_call.1} parent=1 // pred_region
      _
    $region5: #{tpu_custom_call.1} parent=1 // pred_fallthru
      _
    // Predicated region
    $region6: #{tpu_custom_call.1} parent=1 // pred_check
      _
    $region7: #{tpu_custom_call.1} parent=1 // pred_check_branch
      %14 = sbr.rel (0) target = $region9
    $region8: #{tpu_custom_call.1} parent=1 // pred_region
      _
    $region9: #{tpu_custom_call.1} parent=1 // pred_fallthru
      _
    // Predicated region
    $region10: #{tpu_custom_call.1} parent=1 // pred_check
      _
    $region11: #{tpu_custom_call.1} parent=1 // pred_check_branch
      %16 = sbr.rel (0) target = $region13
    $region12: #{tpu_custom_call.1} parent=1 // pred_region
      _
    $region13: #{tpu_custom_call.1} parent=1 // pred_fallthru
      _
    // Predicated region
    $region14: #{tpu_custom_call.1} parent=1 // pred_check
      _
    $region15: #{tpu_custom_call.1} parent=1 // pred_check_branch
      %18 = sbr.rel (0) target = $region17
    $region16: #{tpu_custom_call.1} parent=1 // pred_region
      _
    $region17: #{tpu_custom_call.1} parent=1 // pred_fallthru
      _
    // Predicated region
    $region18: #{tpu_custom_call.1} parent=1 // pred_check
      _
    $region19: #{tpu_custom_call.1} parent=1 // pred_check_branch
      %20 = sbr.rel (0) target = $region21
    $region20: #{tpu_custom_call.1} parent=1 // pred_region
      _
    $region21: #{tpu_custom_call.1} parent=1 // pred_fallthru
      _
    %p22 = scmp.eq.s32.totalorder 0, 0
    // Predicated region
    $region22: #{tpu_custom_call.1} parent=1 // pred_check
      %p23 = pneg %p22
    $region23: #{tpu_custom_call.1} parent=1 // pred_check_branch
      %25 = sbr.rel (%p23) target = $region25
    $region24: #{tpu_custom_call.1} parent=1 // pred_region
      %v26 = vld [vmem:[%s0] sm:$0xff]
      %v27 = vld [vmem:[%s0 + $0x8] sm:$0xff]
      %v28 = vpack.c.bf16 %v26, %v26
      %v29 = vpack.c.bf16 %v27, %v27
      %vm30 = vcmask 257024
      %31 = vst.msk [vmem:[#allocation2] sm:$0xf] %vm30, %v28
      %32 = vst.msk [vmem:[#allocation2 + $0x4] sm:$0xf] %vm30, %v29
      %vm33 = vcmask 261120
      %34 = vst.msk [vmem:[#allocation3] sm:$0xff] %vm33, 0.0
      %35 = vst.msk [vmem:[#allocation3 + $0x8] sm:$0xff] %vm33, 0.0
    $region25: #{tpu_custom_call.1} parent=1 // pred_fallthru
      _
    %s36 = smul.u32 0, 128
    %s37 = sshra.s32 %s36, 7
    %s38 = sand.u32 %s36, 127
    %s39 = smul.addr %s37, 4
    %s40 = scalar_lea.vmem %s1, %s39
    %v41 = vld [vmem:[%s40] sm:$0xf]
    %v42 = vld [vmem:[%s40 + $0x4] sm:$0xf]
    %v43 = vld [vmem:[%s40 + $0x8] sm:$0xf]
    %v44 = vld [vmem:[%s40 + $0xc] sm:$0xf]
    %s45 = scalar_lea.vmem %s2, %s37
    %v46 = vld [vmem:[%s45] sm:$0x1]
    %s47 = sshra.s32 %s36, 3
    %s48 = sand.u32 %s36, 7
    %s49 = smul.addr %s47, 4
    %s50 = scalar_lea.vmem %s3, %s49
    %v51 = vld [vmem:[%s50] sm:$0xf]
    %v52 = vld [vmem:[%s50 + $0x4] sm:$0xf]
    %v53 = vld [vmem:[%s50 + $0x8] sm:$0xf]
    %v54 = vld [vmem:[%s50 + $0xc] sm:$0xf]
    %v55 = vld [vmem:[%s50 + $0x10] sm:$0xf]
    %v56 = vld [vmem:[%s50 + $0x14] sm:$0xf]
    %v57 = vld [vmem:[%s50 + $0x18] sm:$0xf]
    %v58 = vld [vmem:[%s50 + $0x1c] sm:$0xf]
    %v59 = vld [vmem:[%s50 + $0x20] sm:$0xf]
    %v60 = vld [vmem:[%s50 + $0x24] sm:$0xf]
    %v61 = vld [vmem:[%s50 + $0x28] sm:$0xf]
    %v62 = vld [vmem:[%s50 + $0x2c] sm:$0xf]
    %v63 = vld [vmem:[%s50 + $0x30] sm:$0xf]
    %v64 = vld [vmem:[%s50 + $0x34] sm:$0xf]
    %v65 = vld [vmem:[%s50 + $0x38] sm:$0xf]
    %v66 = vld [vmem:[%s50 + $0x3c] sm:$0xf]
    %v67 = vld [vmem:[#allocation2] sm:$0xf]
    %v68 = vld [vmem:[#allocation2 + $0x4] sm:$0xf]
    %v70 = vperm.slane %v46, 0
    %v74 = vunpack.c.l.b16 %v67
    %v75 = vunpack.c.l.b16 %v68
    %v76 = vpack.c.b16 %v75, %v74
    %v81 = vunpack.c.l.b16 %v41
    %v82 = vunpack.c.l.b16 %v42
    %v83 = vunpack.c.l.b16 %v43
    %v84 = vunpack.c.l.b16 %v44
    %v85 = vpack.c.b16 %v82, %v81
    %v86 = vpack.c.b16 %v84, %v83
    %vm89 = vcmask 261120
    %v91 = vsel %vm89, %v76, 0
    %93 = vmatpush.bf16.msra.mxu0 0
    %94 = vmatpush.bf16.msra.mxu0 0
    %95 = vmatpush.bf16.msra.mxu0 0
    %96 = vmatpush.bf16.msra.mxu0 0
    %97 = vmatpush.bf16.msra.mxu0 0
    %98 = vmatpush.bf16.msra.mxu0 0
    %99 = vmatpush.bf16.msra.mxu0 %v86
    %100 = vmatpush.bf16.msra.mxu0 %v85
    %101 = vmatmul.bf16.gmra.mxu0 %v91
    %v102 = vpop.f32.mrf.mxu0
    %v103 = vadd.f32 %v70, %v102
    %v104 = vpop.f32.mrf.mxu0
    %v105 = vadd.f32 %v70, %v104
    %106 = vdwg.mxu0
    %v107 = vmul.f32 %v103, 0.5
    %v108 = vmul.f32 %v105, 0.5
    %v109 = vmul.f32 %v103, 0.044715
    %v110 = vmul.f32 %v105, 0.044715
    %v111 = vmul.f32 %v109, %v103
    %v112 = vmul.f32 %v110, %v105
    %v113 = vmul.f32 %v111, %v103
    %v114 = vmul.f32 %v112, %v105
    %v115 = vadd.f32 %v103, %v113
    %v116 = vadd.f32 %v105, %v114
    %v117 = vmul.f32 %v115, 0.7978846
    %v118 = vmul.f32 %v116, 0.7978846
    %v119 = vtanh.pop %v117
    %v120 = vtanh.pop %v118
    %v121 = vadd.f32 %v119, 1.0
    %v122 = vadd.f32 %v120, 1.0
    %v123 = vmul.f32 %v107, %v121
    %v124 = vmul.f32 %v108, %v122
    %v125 = vld [vmem:[#allocation3] sm:$0xff]
    %v126 = vld [vmem:[#allocation3 + $0x8] sm:$0xff]
    %v127 = vpack.c.bf16 %v124, %v123
    %v144 = vunpack.c.l.b16 %v51
    %v145 = vunpack.c.l.b16 %v52
    %v146 = vunpack.c.l.b16 %v53
    %v147 = vunpack.c.l.b16 %v54
    %v148 = vunpack.c.l.b16 %v55
    %v149 = vunpack.c.l.b16 %v56
    %v150 = vunpack.c.l.b16 %v57
    %v151 = vunpack.c.l.b16 %v58
    %v152 = vunpack.c.l.b16 %v59
    %v153 = vunpack.c.l.b16 %v60
    %v154 = vunpack.c.l.b16 %v61
    %v155 = vunpack.c.l.b16 %v62
    %v156 = vunpack.c.l.b16 %v63
    %v157 = vunpack.c.l.b16 %v64
    %v158 = vunpack.c.l.b16 %v65
    %v159 = vunpack.c.l.b16 %v66
    %v160 = vpack.c.b16 %v145, %v144
    %v161 = vpack.c.b16 %v147, %v146
    %v162 = vpack.c.b16 %v149, %v148
    %v163 = vpack.c.b16 %v151, %v150
    %v164 = vpack.c.b16 %v153, %v152
    %v165 = vpack.c.b16 %v155, %v154
    %v166 = vpack.c.b16 %v157, %v156
    %v167 = vpack.c.b16 %v159, %v158
    %176 = vmatpush.bf16.msra.mxu0 %v167
    %177 = vmatpush.bf16.msra.mxu0 %v166
    %178 = vmatpush.bf16.msra.mxu0 %v165
    %179 = vmatpush.bf16.msra.mxu0 %v164
    %180 = vmatpush.bf16.msra.mxu0 %v163
    %181 = vmatpush.bf16.msra.mxu0 %v162
    %182 = vmatpush.bf16.msra.mxu0 %v161
    %183 = vmatpush.bf16.msra.mxu0 %v160
    %184 = vmatmul.bf16.gmra.mxu0 %v127
    %v185 = vpop.f32.mrf.mxu0
    %v186 = vadd.f32 0.0, %v185
    %v187 = vpop.f32.mrf.mxu0
    %v188 = vadd.f32 0.0, %v187
    %189 = vdwg.mxu0
    %v190 = vadd.f32 %v125, %v186
    %v191 = vadd.f32 %v126, %v188
    %192 = vst.msk [vmem:[#allocation3] sm:$0xff] %vm89, %v190
    %193 = vst.msk [vmem:[#allocation3 + $0x8] sm:$0xff] %vm89, %v191
    // Predicated region
    $region26: #{tpu_custom_call.1} parent=1 // pred_check
      %p194 = pneg %p22
    $region27: #{tpu_custom_call.1} parent=1 // pred_check_branch
      %196 = sbr.rel (%p194) target = $region29
    $region28: #{tpu_custom_call.1} parent=1 // pred_region
      %v197 = vld [vmem:[#allocation3] sm:$0xff]
      %v198 = vld [vmem:[#allocation3 + $0x8] sm:$0xff]
      %v199 = vld [vmem:[%s4] sm:$0x1]
      %v201 = vperm.slane %v199, 0
      %v203 = vadd.f32 %v197, %v201
      %v204 = vadd.f32 %v198, %v201
      %205 = vst.msk [vmem:[#allocation3] sm:$0xff] %vm89, %v203
      %206 = vst.msk [vmem:[#allocation3 + $0x8] sm:$0xff] %vm89, %v204
    $region29: #{tpu_custom_call.1} parent=1 // pred_fallthru
      _
    // Predicated region
    $region30: #{tpu_custom_call.1} parent=1 // pred_check
      _
    $region31: #{tpu_custom_call.1} parent=1 // pred_check_branch
      %208 = sbr.rel (0) target = $region33
    $region32: #{tpu_custom_call.1} parent=1 // pred_region
      %210 = vsyncadd [#allocation4], 0
      %s211 = sshll.u32 [#allocation3], 4
      %s212 = int_to_ptr.vmem [resolvable:$true] %s211
      %s213 = sshll.u32 %s5, 4
      %s214 = int_to_ptr.hbm [resolvable:$true] %s213
      %219 = dma.vmem_to_hbm [thread:$0]  %s212, 256, %s214, [#allocation4], 128, 128, 8
    $region33: #{tpu_custom_call.1} parent=1 // pred_fallthru
      _
    // Predicated region
    $region34: #{tpu_custom_call.1} parent=1 // pred_check
      _
    $region35: #{tpu_custom_call.1} parent=1 // pred_check_branch
      %221 = sbr.rel (0) target = $region37
    $region36: #{tpu_custom_call.1} parent=1 // pred_region
      %223 = dma.done [#allocation4], 256
    $region37: #{tpu_custom_call.1} parent=1 // pred_fallthru
      _
    %224 = vsyncpa [#allocation4], 1

</llo_original>
